<compile_context>
chip_gen: v7x
topology: tpu7x:2x2x1
jax: 0.10.0
libtpu: 0.0.40
codegen_flags: <defaults>
</compile_context>

<pallas_src>
import jax
import jax.numpy as jnp
from jax import lax
from jax.experimental import pallas as pl
from jax.experimental.pallas import tpu as pltpu


def _round_up(x, m):
    return (x + m - 1) // m * m


def _vmem_budget_bytes():
    """VMEM limit to request: ~70% of physical, capped at 64 MiB."""
    phys = 128 * 1024 * 1024
    try:
        info = pltpu.get_tpu_info()
        phys = int(getattr(info, "vmem_capacity_bytes", phys))
    except Exception:
        pass
    return min(64 * 1024 * 1024, int(phys * 0.7))


def _num_tensorcores():
    """Best-effort TensorCore count (defaults to 1 if unknown)."""
    try:
        info = pltpu.get_tpu_info()
        for name in ("num_cores", "core_count", "num_tensorcores",
                     "tensor_cores_per_chip", "cores_per_chip"):
            v = getattr(info, name, None)
            if v:
                return int(v)
    except Exception:
        pass
    return 1


def _pick_tiling(B, H, itemsize, vmem_budget_bytes, num_cores):
    """Batch tile from a bytes-per-step target, clipped by the VMEM budget."""
    usable = int(vmem_budget_bytes * 0.85)      # headroom: out block, acc, misc
    bytes_per_row = H * itemsize
    tile_target = (4 * 1024 * 1024) // max(bytes_per_row, 1)   # ~4 MiB / input
    tile_vmem = usable // (3 * 2 * bytes_per_row)              # 3 in x 2 bufs
    tile = max(8, min(tile_target, tile_vmem))
    tile -= tile % 8                             # sublane alignment
    tile = max(8, min(tile, _round_up(B, 8)))    # no point exceeding the batch
    n_splits = num_cores if (num_cores > 1 and B >= num_cores * tile) else 1
    return tile, n_splits


def l2_loss(emb0, emb1, emb2, *, batch_tile=None, n_splits=None):
    """Pallas TPU implementation of L2Loss.forward. Returns a scalar f32."""
    assert emb0.shape == emb1.shape == emb2.shape
    assert emb0.ndim == 2
    B, H = emb0.shape

    vmem_budget = _vmem_budget_bytes()
    auto_tile, auto_splits = _pick_tiling(
        B, H, jnp.dtype(emb0.dtype).itemsize, vmem_budget, _num_tensorcores()
    )
    if batch_tile is None:
        batch_tile = auto_tile
    if n_splits is None:
        n_splits = auto_splits
    assert batch_tile % 8 == 0 and batch_tile > 0
    assert n_splits >= 1

    steps = pl.cdiv(B, batch_tile * n_splits)    # reduction steps per split
    last_block = pl.cdiv(B, batch_tile) - 1      # last real block index

    def emb_index(s, i):
        # Clamp so nominally out-of-range blocks re-read the last real block
        # (their rows are all >= B and get masked to zero in the kernel).
        return (jnp.minimum(s * steps + i, last_block), 0)

    def kernel(e0_ref, e1_ref, e2_ref, out_ref, acc_ref):
        step = pl.program_id(1)

        @pl.when(step == 0)
        def _():
            acc_ref[...] = jnp.zeros_like(acc_ref)

        e0 = e0_ref[...].astype(jnp.float32)
        d_c = e0 - e1_ref[...].astype(jnp.float32)
        d_f = e0 - e2_ref[...].astype(jnp.float32)

        # Per-row squared norms along the hidden (lane) axis; keep 2-D shapes.
        sq_c = jnp.sum(d_c * d_c, axis=1, keepdims=True)   # (tile, 1)
        sq_f = jnp.sum(d_f * d_f, axis=1, keepdims=True)   # (tile, 1)
        per_row = jnp.sqrt(sq_c) - jnp.sqrt(sq_f)

        # Mask rows beyond the true batch (ragged last tile / clamped blocks).
        base = (pl.program_id(0) * pl.num_programs(1) + step) * batch_tile
        rows = lax.broadcasted_iota(jnp.int32, (batch_tile, 1), 0) + base
        per_row = jnp.where(rows < B, per_row, 0.0)

        # Scalar accumulator: cross-sublane reduce goes to the idle XLU slot.
        acc_ref[...] += jnp.sum(per_row, keepdims=True)     # (1, 1)

        @pl.when(step == pl.num_programs(1) - 1)
        def _():
            out_ref[...] = jnp.broadcast_to(acc_ref[...], out_ref.shape)

    emb_spec = pl.BlockSpec((batch_tile, H), emb_index)
    # Lane-dense per-split output slab; each split broadcast-fills its block.
    out_spec = pl.BlockSpec((8, 128), lambda s, i: (s, 0))

    out = pl.pallas_call(
        kernel,
        out_shape=jax.ShapeDtypeStruct((n_splits * 8, 128), jnp.float32),
        grid_spec=pltpu.PrefetchScalarGridSpec(
            num_scalar_prefetch=0,
            grid=(n_splits, steps),
            in_specs=[emb_spec, emb_spec, emb_spec],
            out_specs=out_spec,
            scratch_shapes=[pltpu.VMEM((1, 1), jnp.float32)],
        ),
        compiler_params=pltpu.CompilerParams(
            dimension_semantics=("parallel", "arbitrary"),
            vmem_limit_bytes=vmem_budget,
        ),
    )(emb0, emb1, emb2)

    # One representative element per split (the whole slab holds the partial).
    return jnp.sum(out.reshape(n_splits, 8, 128)[:, 0, 0])


def _reference(emb0, emb1, emb2):
    dis_c = jnp.linalg.norm(emb0 - emb1, axis=1)
    dis_f = jnp.linalg.norm(emb0 - emb2, axis=1)
    return jnp.sum(dis_c - dis_f)


if __name__ == "__main__":
    key = jax.random.PRNGKey(0)
    k0, k1, k2 = jax.random.split(key, 3)

    # Small demo shape consistent with the module (module has no parameters).
    B, H = 16, 32
    emb0 = jax.random.normal(k0, (B, H), dtype=jnp.float32)
    emb1 = jax.random.normal(k1, (B, H), dtype=jnp.float32)
    emb2 = jax.random.normal(k2, (B, H), dtype=jnp.float32)

    loss = jax.block_until_ready(l2_loss(emb0, emb1, emb2))
    ref = jax.block_until_ready(_reference(emb0, emb1, emb2))
    assert jnp.allclose(loss, ref, rtol=1e-5, atol=1e-4), (loss, ref)

    # Exercise the tiled / multi-step / dual-stream / ragged (masked) path.
    kk = jax.random.split(jax.random.PRNGKey(1), 3)
    B2, H2 = 1000, 256
    a0 = jax.random.normal(kk[0], (B2, H2), dtype=jnp.float32)
    a1 = jax.random.normal(kk[1], (B2, H2), dtype=jnp.float32)
    a2 = jax.random.normal(kk[2], (B2, H2), dtype=jnp.float32)
    loss2 = jax.block_until_ready(l2_loss(a0, a1, a2, batch_tile=128, n_splits=2))
    ref2 = jax.block_until_ready(_reference(a0, a1, a2))
    assert jnp.allclose(loss2, ref2, rtol=1e-4, atol=1e-2), (loss2, ref2)

    print("KERNEL_OK")
</pallas_src>

<mosaic_0001>
module attributes {stable_mosaic.version = 11 : i64} {
  func.func @kernel(%arg0: i32, %arg1: i32, %arg2: memref<16x32xf32, #tpu.memory_space<vmem>>, %arg3: memref<16x32xf32, #tpu.memory_space<vmem>>, %arg4: memref<16x32xf32, #tpu.memory_space<vmem>>, %arg5: memref<8x128xf32, #tpu.memory_space<vmem>>, %arg6: memref<1x1xf32, #tpu.memory_space<vmem>>) attributes {dimension_semantics = [#tpu.dimension_semantics<parallel>, #tpu.dimension_semantics<arbitrary>], iteration_bounds = array<i64: 1, 1>, scalar_prefetch = 0 : i64, scratch_operands = 1 : i64, tpu.core_type = #tpu.core_type<tc>, window_params = [{transform_indices = @transform_0, window_bounds = array<i64: 16, 32>}, {transform_indices = @transform_1, window_bounds = array<i64: 16, 32>}, {transform_indices = @transform_2, window_bounds = array<i64: 16, 32>}, {transform_indices = @transform_3, window_bounds = array<i64: 8, 128>}]} {
    %c0_i32 = arith.constant 0 : i32
    %0 = arith.cmpi eq, %arg1, %c0_i32 : i32
    %1 = arith.extui %0 : i1 to i32
    %c0_i32_0 = arith.constant 0 : i32
    %2 = arith.cmpi ne, %1, %c0_i32_0 : i32
    scf.if %2 {
      %cst_16 = arith.constant 0.000000e+00 : f32
      %38 = vector.broadcast %cst_16 : f32 to vector<1x1xf32>
      %c0_17 = arith.constant 0 : index
      %c0_18 = arith.constant 0 : index
      %39 = vector.load %arg6[%c0_17, %c0_18] : memref<1x1xf32, #tpu.memory_space<vmem>>, vector<1x1xf32>
      tpu.vector_store %arg6[%c0_17, %c0_18], %38 {strides = array<i32>} : memref<1x1xf32, #tpu.memory_space<vmem>>, vector<1x1xf32>,
    } else {
    }
    %c0 = arith.constant 0 : index
    %c0_1 = arith.constant 0 : index
    %3 = vector.load %arg2[%c0, %c0_1] : memref<16x32xf32, #tpu.memory_space<vmem>>, vector<16x32xf32>
    %c0_2 = arith.constant 0 : index
    %c0_3 = arith.constant 0 : index
    %4 = vector.load %arg3[%c0_2, %c0_3] : memref<16x32xf32, #tpu.memory_space<vmem>>, vector<16x32xf32>
    %5 = arith.subf %3, %4 : vector<16x32xf32>
    %c0_4 = arith.constant 0 : index
    %c0_5 = arith.constant 0 : index
    %6 = vector.load %arg4[%c0_4, %c0_5] : memref<16x32xf32, #tpu.memory_space<vmem>>, vector<16x32xf32>
    %7 = arith.subf %3, %6 : vector<16x32xf32>
    %8 = arith.mulf %5, %5 : vector<16x32xf32>
    %cst = arith.constant dense<0.000000e+00> : vector<16xf32>
    %9 = vector.multi_reduction <add>, %8, %cst [1] : vector<16x32xf32> to vector<16xf32>
    %10 = vector.shape_cast %9 : vector<16xf32> to vector<16x1xf32>
    %11 = arith.mulf %7, %7 : vector<16x32xf32>
    %cst_6 = arith.constant dense<0.000000e+00> : vector<16xf32>
    %12 = vector.multi_reduction <add>, %11, %cst_6 [1] : vector<16x32xf32> to vector<16xf32>
    %13 = vector.shape_cast %12 : vector<16xf32> to vector<16x1xf32>
    %14 = math.sqrt %10 : vector<16x1xf32>
    %15 = math.sqrt %13 : vector<16x1xf32>
    %16 = arith.subf %14, %15 : vector<16x1xf32>
    %c1_i32 = arith.constant 1 : i32
    %17 = arith.muli %arg0, %c1_i32 : i32
    %18 = arith.addi %17, %arg1 : i32
    %c16_i32 = arith.constant 16 : i32
    %19 = arith.muli %18, %c16_i32 : i32
    %20 = tpu.iota {dimensions = array<i32: 0>} : vector<16x1xi32>
    %21 = vector.broadcast %19 : i32 to vector<16x1xi32>
    %22 = arith.addi %20, %21 : vector<16x1xi32>
    %c16_i32_7 = arith.constant 16 : i32
    %23 = vector.broadcast %c16_i32_7 : i32 to vector<16x1xi32>
    %24 = arith.cmpi slt, %22, %23 : vector<16x1xi32>
    %cst_8 = arith.constant 0.000000e+00 : f32
    %25 = vector.broadcast %cst_8 : f32 to vector<16x1xf32>
    %26 = arith.select %24, %16, %25 : vector<16x1xi1>, vector<16x1xf32>
    %c0_9 = arith.constant 0 : index
    %c0_10 = arith.constant 0 : index
    %27 = vector.load %arg6[%c0_9, %c0_10] : memref<1x1xf32, #tpu.memory_space<vmem>>, vector<1x1xf32>
    %28 = vector.shape_cast %26 : vector<16x1xf32> to vector<1x16x1xf32>
    %cst_11 = arith.constant dense<0.000000e+00> : vector<1xf32>
    %29 = vector.multi_reduction <add>, %28, %cst_11 [1, 2] : vector<1x16x1xf32> to vector<1xf32>
    %30 = vector.shape_cast %29 : vector<1xf32> to vector<1x1x1xf32>
    %31 = vector.extract %30[0, 0, 0] : f32 from vector<1x1x1xf32>
    %32 = vector.broadcast %31 : f32 to vector<1x1xf32>
    %33 = arith.addf %27, %32 : vector<1x1xf32>
    %c0_12 = arith.constant 0 : index
    %c0_13 = arith.constant 0 : index
    %34 = vector.load %arg6[%c0_12, %c0_13] : memref<1x1xf32, #tpu.memory_space<vmem>>, vector<1x1xf32>
    tpu.vector_store %arg6[%c0_12, %c0_13], %33 {strides = array<i32>} : memref<1x1xf32, #tpu.memory_space<vmem>>, vector<1x1xf32>,
    %c0_i32_14 = arith.constant 0 : i32
    %35 = arith.cmpi eq, %arg1, %c0_i32_14 : i32
    %36 = arith.extui %35 : i1 to i32
    %c0_i32_15 = arith.constant 0 : i32
    %37 = arith.cmpi ne, %36, %c0_i32_15 : i32
    scf.if %37 {
      %c0_16 = arith.constant 0 : index
      %c0_17 = arith.constant 0 : index
      %38 = vector.load %arg6[%c0_16, %c0_17] : memref<1x1xf32, #tpu.memory_space<vmem>>, vector<1x1xf32>
      %39 = vector.shape_cast %38 : vector<1x1xf32> to vector<1x1xf32>
      %40 = vector.broadcast %39 : vector<1x1xf32> to vector<8x128xf32>
      %c0_18 = arith.constant 0 : index
      %c0_19 = arith.constant 0 : index
      %41 = vector.load %arg5[%c0_18, %c0_19] : memref<8x128xf32, #tpu.memory_space<vmem>>, vector<8x128xf32>
      tpu.vector_store %arg5[%c0_18, %c0_19], %40 {strides = array<i32>} : memref<8x128xf32, #tpu.memory_space<vmem>>, vector<8x128xf32>,
    } else {
    }
    return
  }
  func.func @transform_0(%arg0: i32, %arg1: i32) -> (i32, i32) {
    %c1_i32 = arith.constant 1 : i32
    %0 = arith.muli %arg0, %c1_i32 : i32
    %1 = arith.addi %0, %arg1 : i32
    %c0_i32 = arith.constant 0 : i32
    %2 = arith.minsi %1, %c0_i32 : i32
    %c0_i32_0 = arith.constant 0 : i32
    %c0_i32_1 = arith.constant 0 : i32
    return %2, %c0_i32_0 : i32, i32
  }
  func.func @transform_1(%arg0: i32, %arg1: i32) -> (i32, i32) {
    %c1_i32 = arith.constant 1 : i32
    %0 = arith.muli %arg0, %c1_i32 : i32
    %1 = arith.addi %0, %arg1 : i32
    %c0_i32 = arith.constant 0 : i32
    %2 = arith.minsi %1, %c0_i32 : i32
    %c0_i32_0 = arith.constant 0 : i32
    %c0_i32_1 = arith.constant 0 : i32
    return %2, %c0_i32_0 : i32, i32
  }
  func.func @transform_2(%arg0: i32, %arg1: i32) -> (i32, i32) {
    %c1_i32 = arith.constant 1 : i32
    %0 = arith.muli %arg0, %c1_i32 : i32
    %1 = arith.addi %0, %arg1 : i32
    %c0_i32 = arith.constant 0 : i32
    %2 = arith.minsi %1, %c0_i32 : i32
    %c0_i32_0 = arith.constant 0 : i32
    %c0_i32_1 = arith.constant 0 : i32
    return %2, %c0_i32_0 : i32, i32
  }
  func.func @transform_3(%arg0: i32, %arg1: i32) -> (i32, i32) {
    %c0_i32 = arith.constant 0 : i32
    %c0_i32_0 = arith.constant 0 : i32
    return %arg0, %c0_i32 : i32, i32
  }
}

</mosaic_0001>

<llo_original>
// kernel: tpu_custom_call.1
$region0: #{tpu_custom_call.1}
  #allocation0 [shape = 'u32[]', space=smem, size = 0x4, offset = 0x4, fixed_abs, tag = 'smem constant byte address 0x4 - core index']
  #allocation1 [shape = 'u32[144,128]{1,0:T(1,128)}', space=vmem, size = 0x12000, scoped, tag = 'internal scratch']
  #allocation2 [shape = 'f32[1,1]{1,0:T(1,128)}', space=vmem, size = 0x200, scoped, tag = 'scratch operand']
  %s0 = inlined_call_operand.hbm [shape: f32[16,32], index: 0, kind: input, shape index: {}]
  %s1 = inlined_call_operand.hbm [shape: f32[16,32], index: 1, kind: input, shape index: {}]
  %s2 = inlined_call_operand.hbm [shape: f32[16,32], index: 2, kind: input, shape index: {}]
  %s3 = inlined_call_operand.hbm [shape: f32[8,128], index: 3, kind: output, shape index: {}]
  %s4 = sld [smem:[#allocation0]]
  $region42: #{tpu_custom_call.1} parent=0
    _
  %s6 = ssub.s32 1, %s4
  %s7 = scalar_select 0, %s6, %s4
  $region1: #{tpu_custom_call.1} parent=0
    #allocation3 [shape = 'u8[8192]{0}', space=vmem, size = 0x2000, scoped, tag = 'input window, operand 0, single buffered']
    #allocation4 [shape = 's32[1]{0}', space=sflag, size = 0x4, scoped, tag = 'scoped memory for tpu_custom_call.1']
    #allocation5 [shape = 's32[1]{0}', space=sflag, size = 0x4, scoped, tag = 'scoped memory for tpu_custom_call.1']
    #allocation6 [shape = 'u8[8192]{0}', space=vmem, size = 0x2000, scoped, tag = 'input window, operand 1, single buffered']
    #allocation7 [shape = 's32[1]{0}', space=sflag, size = 0x4, scoped, tag = 'scoped memory for tpu_custom_call.1']
    #allocation8 [shape = 'u8[8192]{0}', space=vmem, size = 0x2000, scoped, tag = 'input window, operand 2, single buffered']
    #allocation9 [shape = 'u8[4096]{0}', space=vmem, size = 0x1000, scoped, tag = 'output window, operand 0, single buffered']
    %8 = vsyncpa [#allocation4], 0
    %9 = vsyncpa [#allocation7], 0
    %10 = vsyncpa [#allocation5], 0
    // Predicated region
    $region2: #{tpu_custom_call.1} parent=1 // pred_check
      _
    $region3: #{tpu_custom_call.1} parent=1 // pred_check_branch
      %12 = sbr.rel (0) target = $region5
    $region4: #{tpu_custom_call.1} parent=1 // pred_region
      %s13 = sadd.s32 0, 0
      %p14 = scmp.lt.s32.totalorder %s13, 0
      %s15 = scalar_select %p14, %s13, 0
      %s16 = smul.u32 2, %s15
      %s18 = ssub.s32 256, 256
      %19 = vsyncadd [#allocation4], %s18
      %s20 = smul.addr %s16, 128
      %s21 = scalar_lea.hbm %s0, %s20
      %s22 = sshll.u32 [#allocation3], 4
      %s23 = int_to_ptr.vmem [resolvable:$true] %s22
      %28 = dma.hbm_to_vmem [thread:$0]  %s21, 256, %s23, [#allocation4], 128, 128, 8
    $region5: #{tpu_custom_call.1} parent=1 // pred_fallthru
      _
    // Predicated region
    $region6: #{tpu_custom_call.1} parent=1 // pred_check
      _
    $region7: #{tpu_custom_call.1} parent=1 // pred_check_branch
      %30 = sbr.rel (0) target = $region9
    $region8: #{tpu_custom_call.1} parent=1 // pred_region
      %s31 = sadd.s32 0, 0
      %p32 = scmp.lt.s32.totalorder %s31, 0
      %s33 = scalar_select %p32, %s31, 0
      %s34 = smul.u32 2, %s33
      %s36 = ssub.s32 256, 256
      %37 = vsyncadd [#allocation7], %s36
      %s38 = smul.addr %s34, 128
      %s39 = scalar_lea.hbm %s1, %s38
      %s40 = sshll.u32 [#allocation6], 4
      %s41 = int_to_ptr.vmem [resolvable:$true] %s40
      %46 = dma.hbm_to_vmem [thread:$0]  %s39, 256, %s41, [#allocation7], 128, 128, 8
    $region9: #{tpu_custom_call.1} parent=1 // pred_fallthru
      _
    // Predicated region
    $region10: #{tpu_custom_call.1} parent=1 // pred_check
      _
    $region11: #{tpu_custom_call.1} parent=1 // pred_check_branch
      %48 = sbr.rel (0) target = $region13
    $region12: #{tpu_custom_call.1} parent=1 // pred_region
      %s49 = sadd.s32 0, 0
      %p50 = scmp.lt.s32.totalorder %s49, 0
      %s51 = scalar_select %p50, %s49, 0
      %s52 = smul.u32 2, %s51
      %s54 = ssub.s32 256, 256
      %55 = vsyncadd [#allocation7], %s54
      %s56 = smul.addr %s52, 128
      %s57 = scalar_lea.hbm %s2, %s56
      %s58 = sshll.u32 [#allocation8], 4
      %s59 = int_to_ptr.vmem [resolvable:$true] %s58
      %64 = dma.hbm_to_vmem [thread:$0]  %s57, 256, %s59, [#allocation7], 128, 128, 8
    $region13: #{tpu_custom_call.1} parent=1 // pred_fallthru
      _
    // Predicated region
    $region14: #{tpu_custom_call.1} parent=1 // pred_check
      _
    $region15: #{tpu_custom_call.1} parent=1 // pred_check_branch
      %66 = sbr.rel (0) target = $region17
    $region16: #{tpu_custom_call.1} parent=1 // pred_region
      %67 = dma.done [#allocation4], 256
    $region17: #{tpu_custom_call.1} parent=1 // pred_fallthru
      _
    // Predicated region
    $region18: #{tpu_custom_call.1} parent=1 // pred_check
      _
    $region19: #{tpu_custom_call.1} parent=1 // pred_check_branch
      %69 = sbr.rel (0) target = $region21
    $region20: #{tpu_custom_call.1} parent=1 // pred_region
      %70 = dma.done [#allocation7], 256
    $region21: #{tpu_custom_call.1} parent=1 // pred_fallthru
      _
    // Predicated region
    $region22: #{tpu_custom_call.1} parent=1 // pred_check
      _
    $region23: #{tpu_custom_call.1} parent=1 // pred_check_branch
      %72 = sbr.rel (0) target = $region25
    $region24: #{tpu_custom_call.1} parent=1 // pred_region
      %73 = dma.done [#allocation7], 256
    $region25: #{tpu_custom_call.1} parent=1 // pred_fallthru
      _
    %s74 = sadd.s32 0, 0
    %p75 = scmp.lt.s32.totalorder %s74, 0
    %s76 = scalar_select %p75, %s74, 0
    %s77 = smul.u32 2, %s76
    %s78 = sadd.s32 0, 0
    %p79 = scmp.lt.s32.totalorder %s78, 0
    %s80 = scalar_select %p79, %s78, 0
    %s81 = smul.u32 2, %s80
    %s82 = sadd.s32 0, 0
    %p83 = scmp.lt.s32.totalorder %s82, 0
    %s84 = scalar_select %p83, %s82, 0
    %s85 = smul.u32 2, %s84
    %p86 = scmp.eq.s32.totalorder 0, 0
    // Predicated region
    $region26: #{tpu_custom_call.1} parent=1 // pred_check
      %p87 = pneg %p86
    $region27: #{tpu_custom_call.1} parent=1 // pred_check_branch
      %89 = sbr.rel (%p87) target = $region29
    $region28: #{tpu_custom_call.1} parent=1 // pred_region
      %vm90 = vcmask 0
      %91 = vst.msk [vmem:[#allocation2] sm:$0x1] %vm90, 0.0
    $region29: #{tpu_custom_call.1} parent=1 // pred_fallthru
      _
    %v92 = vld [vmem:[#allocation3] sm:$0xff]
    %v93 = vld [vmem:[#allocation3 + $0x8] sm:$0xff]
    %v94 = vld [vmem:[#allocation6] sm:$0xff]
    %v95 = vld [vmem:[#allocation6 + $0x8] sm:$0xff]
    %v96 = vsub.f32 %v92, %v94
    %v97 = vsub.f32 %v93, %v95
    %v98 = vld [vmem:[#allocation8] sm:$0xff]
    %v99 = vld [vmem:[#allocation8 + $0x8] sm:$0xff]
    %v100 = vsub.f32 %v92, %v98
    %v101 = vsub.f32 %v93, %v99
    %v102 = vmul.f32 %v96, %v96
    %v103 = vmul.f32 %v97, %v97
    %vm104 = vcmask 261120
    %v105 = vsel %vm104, %v102, 0.0
    %106 = vadd.xlane.f32.xlu0 %v105
    %v107 = vpop.xlane.xlu0 %106
    %v108 = vsel %vm104, %v103, 0.0
    %109 = vadd.xlane.f32.xlu0 %v108
    %v110 = vpop.xlane.xlu0 %109
    %v111 = vmul.f32 %v100, %v100
    %v112 = vmul.f32 %v101, %v101
    %v113 = vsel %vm104, %v111, 0.0
    %114 = vadd.xlane.f32.xlu0 %v113
    %v115 = vpop.xlane.xlu0 %114
    %v116 = vsel %vm104, %v112, 0.0
    %117 = vadd.xlane.f32.xlu0 %v116
    %v118 = vpop.xlane.xlu0 %117
    %v119 = vrsqrt.pop %v107
    %v120 = vmul.f32 %v107, %v119
    %vm121 = vcmp.eq.f32.partialorder %v107, inf
    %v122 = vsel %vm121, %v107, %v120
    %vm123 = vcmp.eq.f32.partialorder %v107, 0.0
    %v124 = vand.u32 %v107, 2147483648
    %v125 = vsel %vm123, %v124, %v122
    %v126 = vrsqrt.pop %v110
    %v127 = vmul.f32 %v110, %v126
    %vm128 = vcmp.eq.f32.partialorder %v110, inf
    %v129 = vsel %vm128, %v110, %v127
    %vm130 = vcmp.eq.f32.partialorder %v110, 0.0
    %v131 = vand.u32 %v110, 2147483648
    %v132 = vsel %vm130, %v131, %v129
    %v133 = vrsqrt.pop %v115
    %v134 = vmul.f32 %v115, %v133
    %vm135 = vcmp.eq.f32.partialorder %v115, inf
    %v136 = vsel %vm135, %v115, %v134
    %vm137 = vcmp.eq.f32.partialorder %v115, 0.0
    %v138 = vand.u32 %v115, 2147483648
    %v139 = vsel %vm137, %v138, %v136
    %v140 = vrsqrt.pop %v118
    %v141 = vmul.f32 %v118, %v140
    %vm142 = vcmp.eq.f32.partialorder %v118, inf
    %v143 = vsel %vm142, %v118, %v141
    %vm144 = vcmp.eq.f32.partialorder %v118, 0.0
    %v145 = vand.u32 %v118, 2147483648
    %v146 = vsel %vm144, %v145, %v143
    %v147 = vsub.f32 %v125, %v139
    %v148 = vsub.f32 %v132, %v146
    %s149 = sadd.s32 0, 0
    %s150 = smul.u32 %s149, 16
    %v151 = vlaneseq
    %v152 = vshrl.u32 %v151, 7
    %v153 = vadd.s32 %v152, 8
    %v154 = vstv %s150
    %v155 = vadd.s32 %v152, %v154
    %v156 = vadd.s32 %v153, %v154
    %vm157 = vcmp.lt.s32.totalorder %v155, 16
    %vm158 = vcmp.lt.s32.totalorder %v156, 16
    %v159 = vsel %vm157, %v147, 0.0
    %v160 = vsel %vm158, %v148, 0.0
    %v161 = vld [vmem:[#allocation2] sm:$0x1]
    %vm162 = vcmask 7168
    %v163 = vsel %vm162, %v159, 0.0
    %v164 = vsel %vm162, %v160, 0.0
    %v165 = vadd.f32 %v163, %v164
    %166 = vadd.xlane.f32.xlu0 %v165
    %v167 = vpop.xlane.xlu0 %166
    %v168 = vrot.slane %v167, 4
    %v169 = vadd.f32 %v167, %v168
    %v170 = vrot.slane %v169, 2
    %v171 = vadd.f32 %v169, %v170
    %v172 = vrot.slane %v171, 1
    %v173 = vadd.f32 %v171, %v172
    %s174 = vtos %v173
    %v175 = vstv %s174
    %v176 = vadd.f32 %v161, %v175
    %vm177 = vcmask 0
    %178 = vst.msk [vmem:[#allocation2] sm:$0x1] %vm177, %v176
    // Predicated region
    $region30: #{tpu_custom_call.1} parent=1 // pred_check
      %p179 = pneg %p86
    $region31: #{tpu_custom_call.1} parent=1 // pred_check_branch
      %181 = sbr.rel (%p179) target = $region33
    $region32: #{tpu_custom_call.1} parent=1 // pred_region
      %v182 = vld [vmem:[#allocation2] sm:$0x1]
      %v184 = vlaneseq
      %v185 = vshrl.u32 %v184, 7
      %v186 = vsub.s32 0, %v185
      %v187 = vrot.slane %v182, %v186
      %188 = vset.pattern.permute.xlu0 0
      %189 = vperm.xlu0 %188, %v187
      %v190 = vpop.permute.xlu0 %189
      %192 = vst [vmem:[#allocation9] sm:$0xff] %v190
    $region33: #{tpu_custom_call.1} parent=1 // pred_fallthru
      _
    // Predicated region
    $region34: #{tpu_custom_call.1} parent=1 // pred_check
      _
    $region35: #{tpu_custom_call.1} parent=1 // pred_check_branch
      %194 = sbr.rel (0) target = $region37
    $region36: #{tpu_custom_call.1} parent=1 // pred_region
      %s196 = ssub.s32 128, 128
      %197 = vsyncadd [#allocation5], %s196
      %s199 = sshll.u32 [#allocation9], 4
      %s200 = int_to_ptr.vmem [resolvable:$true] %s199
      %202 = dma.vmem_to_hbm [thread:$0]  %s200, 128, %s3, [#allocation5]
    $region37: #{tpu_custom_call.1} parent=1 // pred_fallthru
      _
    // Predicated region
    $region38: #{tpu_custom_call.1} parent=1 // pred_check
      _
    $region39: #{tpu_custom_call.1} parent=1 // pred_check_branch
      %204 = sbr.rel (0) target = $region41
    $region40: #{tpu_custom_call.1} parent=1 // pred_region
      %205 = dma.done [#allocation5], 128
    $region41: #{tpu_custom_call.1} parent=1 // pred_fallthru
      _
    %206 = vsyncpa [#allocation4], 1
    %207 = vsyncpa [#allocation7], 1
    %208 = vsyncpa [#allocation5], 1

</llo_original>
